<compile_context>
chip_gen: v5e
topology: v5e:2x2
jax: 0.10.0
libtpu: 0.0.40
codegen_flags: <defaults>
</compile_context>

<pallas_src>
import functools

import jax
import jax.numpy as jnp
from jax.experimental import pallas as pl
from jax.experimental.pallas import tpu as pltpu


def _self_attention_kernel(x_ref, gamma_ref, beta_ref,
                           wqkv_ref, bqkv_ref, wo_ref, bo_ref, o_ref,
                           *, num_heads, num_qk, num_v, eps,
                           block_b, seq_len, matmul_dtype):
    TB, N = block_b, seq_len
    D = x_ref.shape[-1]
    H = num_heads
    c_qk = num_qk // H
    c_v = num_v // H
    num_out = o_ref.shape[-1]

    # Fold TB batch elements into the matmul M dimension: (TB, N, D) -> (TB*N, D).
    x = x_ref[...].reshape(TB * N, D).astype(jnp.float32)

    # ---- LayerNorm (f32, over channel dim) ----
    mu = jnp.mean(x, axis=-1, keepdims=True)
    var = jnp.mean((x - mu) ** 2, axis=-1, keepdims=True)
    xn = (x - mu) * jax.lax.rsqrt(var + eps)
    xn = xn * gamma_ref[...] + beta_ref[...]                 # gamma/beta: (1, D) f32

    # ---- Fused Q/K/V projection: ONE matmul, bf16 operands, f32 accumulation ----
    # (dp_scale is already folded into the q columns / bias by the wrapper; the
    #  fused weight is zero-padded to a multiple of 128 output lanes.)
    xn_mm = xn.astype(matmul_dtype)
    qkv = jnp.dot(xn_mm, wqkv_ref[...],
                  preferred_element_type=jnp.float32) + bqkv_ref[...]

    q = qkv[:, :num_qk]
    k = qkv[:, num_qk:2 * num_qk]
    v = qkv[:, 2 * num_qk:2 * num_qk + num_v]

    # ---- One relayout per tile: heads onto a batch axis (TB*H, N, c) ----
    def to_heads(t, c):
        return (t.reshape(TB, N, H, c)
                 .transpose(0, 2, 1, 3)
                 .reshape(TB * H, N, c)
                 .astype(matmul_dtype))

    q_h = to_heads(q, c_qk)
    k_h = to_heads(k, c_qk)
    v_h = to_heads(v, c_v)

    # ---- Batched attention over all (batch, head) pairs ----
    # Contract the last axis of q/k -> no materialized k transpose.
    s = jnp.einsum('bqc,bkc->bqk', q_h, k_h,
                   preferred_element_type=jnp.float32)       # (TB*H, N, N) f32
    s = s - jnp.max(s, axis=-1, keepdims=True)
    p = jnp.exp(s)
    # Softmax denominator folded in after the PV matmul; EUP reciprocal instead
    # of an (N, N) VPU divide.
    inv = pl.reciprocal(jnp.sum(p, axis=-1, keepdims=True), approx=True)

    o_h = jnp.einsum('bqk,bkc->bqc', p.astype(matmul_dtype), v_h,
                     preferred_element_type=jnp.float32) * inv   # (TB*H, N, c_v)

    # ---- Gather heads back and do ONE output-projection matmul ----
    o_flat = (o_h.reshape(TB, H, N, c_v)
                  .transpose(0, 2, 1, 3)
                  .reshape(TB * N, num_v))
    out = jnp.dot(o_flat.astype(matmul_dtype), wo_ref[...],
                  preferred_element_type=jnp.float32) + bo_ref[...]

    # TODO(synk): pad_mask (boolean key padding) not wired in; module default is None.
    # TODO(synk): for large N, switch to flash-style query/key tiling with online
    #             softmax (needed to keep the (TB*H, N, N) scores inside VMEM).

    # ---- Single tile-wide store ----
    o_ref[...] = out.reshape(TB, N, num_out).astype(o_ref.dtype)


def _pick_batch_block(B, N, D, num_out, *, target_rows=1024,
                      block_bytes_cap=8 << 20, min_grid=2):
    """Largest divisor of B with TB*N <= target rows, small f32 blocks, and
    (when possible) at least `min_grid` grid steps so the parallel batch axis
    can shard across v7x's two TensorCores."""
    max_tb = B if B < min_grid else B // min_grid
    best = 1
    for tb in range(1, max_tb + 1):
        if B % tb:
            continue
        rows = tb * N
        blk_bytes = 2 * tb * N * (D + num_out) * 4   # double-buffered x/out blocks
        if rows <= max(target_rows, N) and blk_bytes <= block_bytes_cap:
            best = tb
    return best


def self_attention_pallas(x, params, *, num_heads, eps=1e-5,
                          matmul_dtype=jnp.bfloat16):
    """x: (B, N, D) float32.  params: dict of weights stored (in, out)."""
    B, N, D = x.shape
    wq, bq = params["wq"], params["bq"]
    wk, bk = params["wk"], params["bk"]
    wv, bv = params["wv"], params["bv"]
    wo, bo = params["wo"], params["bo"]
    gamma, beta = params["gamma"], params["beta"]

    num_qk = wq.shape[1]
    num_v = wv.shape[1]
    num_out = wo.shape[1]
    if num_qk % num_heads or num_v % num_heads:
        raise ValueError("num_qk_channels / num_v_channels must be divisible by num_heads")
    dp_scale = (num_qk // num_heads) ** (-0.5)

    # Fused QKV weight (dp_scale folded into the q columns), padded to a
    # multiple of 128 output lanes so the projection store stays unmasked.
    wqkv = jnp.concatenate([wq * dp_scale, wk, wv], axis=1)
    bqkv = jnp.concatenate([bq * dp_scale, bk, bv], axis=0)
    qkv_w = 2 * num_qk + num_v
    pad = (-qkv_w) % 128
    if pad:
        wqkv = jnp.pad(wqkv, ((0, 0), (0, pad)))
        bqkv = jnp.pad(bqkv, ((0, pad),))
    qkv_w_p = qkv_w + pad

    # bf16 matmul weights (MXU-native rate, f32 accumulation; halves weight VMEM).
    wqkv_c = wqkv.astype(matmul_dtype)
    wo_c = wo.astype(matmul_dtype)

    # LayerNorm params and biases stay f32 (added after f32-accumulated matmuls),
    # laid out as (1, C) rows.
    gamma2 = gamma.reshape(1, D).astype(jnp.float32)
    beta2 = beta.reshape(1, D).astype(jnp.float32)
    bqkv2 = bqkv.reshape(1, -1).astype(jnp.float32)
    bo2 = bo.reshape(1, -1).astype(jnp.float32)

    tb = _pick_batch_block(B, N, D, num_out)
    grid = (B // tb,)

    kernel = functools.partial(
        _self_attention_kernel,
        num_heads=num_heads, num_qk=num_qk, num_v=num_v, eps=eps,
        block_b=tb, seq_len=N, matmul_dtype=matmul_dtype,
    )

    full = lambda shape: pl.BlockSpec(shape, lambda b: (0,) * len(shape))

    # Explicit VMEM budget: double-buffered weights + x/out blocks + rough
    # intermediate estimate + headroom, capped at 56 MiB (v7x has 64 MiB/TC).
    weight_bytes = sum(int(a.size) * a.dtype.itemsize
                       for a in (wqkv_c, wo_c, bqkv2, bo2, gamma2, beta2))
    block_bytes = 2 * tb * N * (D + num_out) * 4
    rows = tb * N
    inter_bytes = rows * (2 * D + 2 * qkv_w_p + num_v + num_out) * 4 \
        + 3 * tb * num_heads * N * N * 4
    vmem_limit = int(min(max(2 * weight_bytes + block_bytes + inter_bytes + (8 << 20),
                             32 << 20), 56 << 20))

    return pl.pallas_call(
        kernel,
        out_shape=jax.ShapeDtypeStruct((B, N, num_out), x.dtype),
        grid_spec=pltpu.PrefetchScalarGridSpec(
            num_scalar_prefetch=0,
            grid=grid,
            in_specs=[
                pl.BlockSpec((tb, N, D), lambda b: (b, 0, 0)),   # x (batch-tiled)
                full((1, D)), full((1, D)),                      # gamma, beta
                full((D, qkv_w_p)), full((1, qkv_w_p)),          # fused wqkv, bqkv
                full((num_v, num_out)), full((1, num_out)),      # wo, bo
            ],
            out_specs=pl.BlockSpec((tb, N, num_out), lambda b: (b, 0, 0)),
        ),
        compiler_params=pltpu.CompilerParams(
            dimension_semantics=("parallel",),
            vmem_limit_bytes=vmem_limit,
        ),
    )(x, gamma2, beta2, wqkv_c, bqkv2, wo_c, bo2)


def self_attention_ref(x, params, *, num_heads, eps=1e-5):
    """Pure-JAX f32 reference mirroring the PyTorch forward."""
    gamma, beta = params["gamma"], params["beta"]
    mu = jnp.mean(x, axis=-1, keepdims=True)
    var = jnp.mean((x - mu) ** 2, axis=-1, keepdims=True)
    xn = (x - mu) / jnp.sqrt(var + eps) * gamma + beta

    q = xn @ params["wq"] + params["bq"]
    k = xn @ params["wk"] + params["bk"]
    v = xn @ params["wv"] + params["bv"]

    B, N, _ = x.shape
    H = num_heads
    c_qk = q.shape[-1] // H
    c_v = v.shape[-1] // H
    q = q.reshape(B, N, H, c_qk).transpose(0, 2, 1, 3) * (c_qk ** -0.5)
    k = k.reshape(B, N, H, c_qk).transpose(0, 2, 1, 3)
    v = v.reshape(B, N, H, c_v).transpose(0, 2, 1, 3)

    attn = jnp.einsum("bhic,bhjc->bhij", q, k)
    attn = jax.nn.softmax(attn, axis=-1)
    o = jnp.einsum("bhij,bhjc->bhic", attn, v)
    o = o.transpose(0, 2, 1, 3).reshape(B, N, H * c_v)
    return o @ params["wo"] + params["bo"]


def init_params(key, num_channels, num_qk_channels, num_v_channels, num_output_channels):
    ks = jax.random.split(key, 8)
    s = 0.1
    return {
        "gamma": jnp.ones((num_channels,), jnp.float32),
        "beta": jnp.zeros((num_channels,), jnp.float32),
        "wq": s * jax.random.normal(ks[0], (num_channels, num_qk_channels), jnp.float32),
        "bq": s * jax.random.normal(ks[1], (num_qk_channels,), jnp.float32),
        "wk": s * jax.random.normal(ks[2], (num_channels, num_qk_channels), jnp.float32),
        "bk": s * jax.random.normal(ks[3], (num_qk_channels,), jnp.float32),
        "wv": s * jax.random.normal(ks[4], (num_channels, num_v_channels), jnp.float32),
        "bv": s * jax.random.normal(ks[5], (num_v_channels,), jnp.float32),
        "wo": s * jax.random.normal(ks[6], (num_v_channels, num_output_channels), jnp.float32),
        "bo": s * jax.random.normal(ks[7], (num_output_channels,), jnp.float32),
    }


if __name__ == "__main__":
    B, N, D = 2, 8, 32            # batch, seq, channels
    num_heads = 4                 # 8 qk-channels / head, 8 v-channels / head

    key = jax.random.PRNGKey(0)
    k_x, k_p = jax.random.split(key)
    x = jax.random.normal(k_x, (B, N, D), jnp.float32)
    params = init_params(k_p, D, D, D, D)

    out = self_attention_pallas(x, params, num_heads=num_heads)
    out = jax.block_until_ready(out)

    ref = self_attention_ref(x, params, num_heads=num_heads)
    assert out.shape == (B, N, D)
    # bf16 MXU operands (f32 accumulation) + approx EUP reciprocal -> bf16-level tol.
    max_diff = float(jnp.max(jnp.abs(out - ref)))
    assert jnp.allclose(out, ref, atol=2e-2, rtol=2e-2), f"mismatch vs reference, max|diff|={max_diff}"

    print("KERNEL_OK")
</pallas_src>

<mosaic_0001>
module attributes {stable_mosaic.version = 11 : i64} {
  func.func @_self_attention_kernel(%arg0: i32, %arg1: memref<1x8x32xf32, #tpu.memory_space<vmem>>, %arg2: memref<1x32xf32, #tpu.memory_space<vmem>>, %arg3: memref<1x32xf32, #tpu.memory_space<vmem>>, %arg4: memref<32x128xbf16, #tpu.memory_space<vmem>>, %arg5: memref<1x128xf32, #tpu.memory_space<vmem>>, %arg6: memref<32x32xbf16, #tpu.memory_space<vmem>>, %arg7: memref<1x32xf32, #tpu.memory_space<vmem>>, %arg8: memref<1x8x32xf32, #tpu.memory_space<vmem>>) attributes {dimension_semantics = [#tpu.dimension_semantics<parallel>], iteration_bounds = array<i64: 2>, scalar_prefetch = 0 : i64, scratch_operands = 0 : i64, tpu.core_type = #tpu.core_type<tc>, window_params = [{transform_indices = @transform_0, window_bounds = array<i64: 1, 8, 32>}, {pipeline_mode = #tpu.pipeline_mode<synchronous>, transform_indices = @transform_1, window_bounds = array<i64: 1, 32>}, {pipeline_mode = #tpu.pipeline_mode<synchronous>, transform_indices = @transform_2, window_bounds = array<i64: 1, 32>}, {pipeline_mode = #tpu.pipeline_mode<synchronous>, transform_indices = @transform_3, window_bounds = array<i64: 32, 128>}, {pipeline_mode = #tpu.pipeline_mode<synchronous>, transform_indices = @transform_4, window_bounds = array<i64: 1, 128>}, {pipeline_mode = #tpu.pipeline_mode<synchronous>, transform_indices = @transform_5, window_bounds = array<i64: 32, 32>}, {pipeline_mode = #tpu.pipeline_mode<synchronous>, transform_indices = @transform_6, window_bounds = array<i64: 1, 32>}, {transform_indices = @transform_7, window_bounds = array<i64: 1, 8, 32>}]} {
    %c0 = arith.constant 0 : index
    %c0_0 = arith.constant 0 : index
    %c0_1 = arith.constant 0 : index
    %0 = vector.load %arg1[%c0, %c0_0, %c0_1] : memref<1x8x32xf32, #tpu.memory_space<vmem>>, vector<1x8x32xf32>
    %1 = vector.shape_cast %0 : vector<1x8x32xf32> to vector<8x32xf32>
    %cst = arith.constant dense<0.000000e+00> : vector<8xf32>
    %2 = vector.multi_reduction <add>, %1, %cst [1] : vector<8x32xf32> to vector<8xf32>
    %3 = vector.shape_cast %2 : vector<8xf32> to vector<8x1xf32>
    %cst_2 = arith.constant 3.200000e+01 : f32
    %4 = vector.broadcast %cst_2 : f32 to vector<8x1xf32>
    %5 = arith.divf %3, %4 : vector<8x1xf32>
    %6 = vector.broadcast %5 : vector<8x1xf32> to vector<8x32xf32>
    %7 = arith.subf %1, %6 : vector<8x32xf32>
    %8 = arith.mulf %7, %7 : vector<8x32xf32>
    %cst_3 = arith.constant dense<0.000000e+00> : vector<8xf32>
    %9 = vector.multi_reduction <add>, %8, %cst_3 [1] : vector<8x32xf32> to vector<8xf32>
    %10 = vector.shape_cast %9 : vector<8xf32> to vector<8x1xf32>
    %cst_4 = arith.constant 3.200000e+01 : f32
    %11 = vector.broadcast %cst_4 : f32 to vector<8x1xf32>
    %12 = arith.divf %10, %11 : vector<8x1xf32>
    %13 = vector.broadcast %5 : vector<8x1xf32> to vector<8x32xf32>
    %14 = arith.subf %1, %13 : vector<8x32xf32>
    %cst_5 = arith.constant 9.99999974E-6 : f32
    %15 = vector.broadcast %cst_5 : f32 to vector<8x1xf32>
    %16 = arith.addf %12, %15 : vector<8x1xf32>
    %17 = math.rsqrt %16 : vector<8x1xf32>
    %18 = vector.broadcast %17 : vector<8x1xf32> to vector<8x32xf32>
    %19 = arith.mulf %14, %18 : vector<8x32xf32>
    %c0_6 = arith.constant 0 : index
    %c0_7 = arith.constant 0 : index
    %20 = vector.load %arg2[%c0_6, %c0_7] : memref<1x32xf32, #tpu.memory_space<vmem>>, vector<1x32xf32>
    %21 = vector.broadcast %20 : vector<1x32xf32> to vector<8x32xf32>
    %22 = arith.mulf %19, %21 : vector<8x32xf32>
    %c0_8 = arith.constant 0 : index
    %c0_9 = arith.constant 0 : index
    %23 = vector.load %arg3[%c0_8, %c0_9] : memref<1x32xf32, #tpu.memory_space<vmem>>, vector<1x32xf32>
    %24 = vector.broadcast %23 : vector<1x32xf32> to vector<8x32xf32>
    %25 = arith.addf %22, %24 : vector<8x32xf32>
    %26 = arith.truncf %25 : vector<8x32xf32> to vector<8x32xbf16>
    %c0_10 = arith.constant 0 : index
    %c0_11 = arith.constant 0 : index
    %27 = vector.load %arg4[%c0_10, %c0_11] : memref<32x128xbf16, #tpu.memory_space<vmem>>, vector<32x128xbf16>
    %cst_12 = arith.constant dense<0.000000e+00> : vector<8x128xf32>
    %28 = tpu.matmul %26, %27, %cst_12 {dimension_numbers = #tpu.dot_dimension_numbers<[1], [0], [0], [1], [0, 0, 1, 1], [], []>} : vector<8x32xbf16>, vector<32x128xbf16>, vector<8x128xf32> -> vector<8x128xf32>
    %c0_13 = arith.constant 0 : index
    %c0_14 = arith.constant 0 : index
    %29 = vector.load %arg5[%c0_13, %c0_14] : memref<1x128xf32, #tpu.memory_space<vmem>>, vector<1x128xf32>
    %30 = vector.broadcast %29 : vector<1x128xf32> to vector<8x128xf32>
    %31 = arith.addf %28, %30 : vector<8x128xf32>
    %32 = vector.extract_strided_slice %31 {offsets = [0, 0], sizes = [8, 32], strides = [1, 1]} : vector<8x128xf32> to vector<8x32xf32>
    %33 = vector.extract_strided_slice %31 {offsets = [0, 32], sizes = [8, 32], strides = [1, 1]} : vector<8x128xf32> to vector<8x32xf32>
    %34 = vector.extract_strided_slice %31 {offsets = [0, 64], sizes = [8, 32], strides = [1, 1]} : vector<8x128xf32> to vector<8x32xf32>
    %35 = vector.shape_cast %32 : vector<8x32xf32> to vector<1x8x4x8xf32>
    %36 = tpu.transpose %35, [0, 2, 1, 3] : vector<1x8x4x8xf32> -> vector<1x4x8x8xf32>
    %37 = vector.shape_cast %36 : vector<1x4x8x8xf32> to vector<4x8x8xf32>
    %38 = arith.truncf %37 : vector<4x8x8xf32> to vector<4x8x8xbf16>
    %39 = vector.shape_cast %33 : vector<8x32xf32> to vector<1x8x4x8xf32>
    %40 = tpu.transpose %39, [0, 2, 1, 3] : vector<1x8x4x8xf32> -> vector<1x4x8x8xf32>
    %41 = vector.shape_cast %40 : vector<1x4x8x8xf32> to vector<4x8x8xf32>
    %42 = arith.truncf %41 : vector<4x8x8xf32> to vector<4x8x8xbf16>
    %43 = vector.shape_cast %34 : vector<8x32xf32> to vector<1x8x4x8xf32>
    %44 = tpu.transpose %43, [0, 2, 1, 3] : vector<1x8x4x8xf32> -> vector<1x4x8x8xf32>
    %45 = vector.shape_cast %44 : vector<1x4x8x8xf32> to vector<4x8x8xf32>
    %46 = arith.truncf %45 : vector<4x8x8xf32> to vector<4x8x8xbf16>
    "tpu.trace_start"() <{level = 10 : i32, message = "bqc,bkc->bqk"}> : () -> ()
    %cst_15 = arith.constant dense<0.000000e+00> : vector<4x8x8xf32>
    %47 = tpu.matmul %38, %42, %cst_15 {dimension_numbers = #tpu.dot_dimension_numbers<[2], [2], [1], [1], [0, 0, 0, 1, 1, 1], [0], [0]>} : vector<4x8x8xbf16>, vector<4x8x8xbf16>, vector<4x8x8xf32> -> vector<4x8x8xf32>
    "tpu.trace_stop"() : () -> ()
    %cst_16 = arith.constant dense<0xFF800000> : vector<4x8xf32>
    %48 = vector.multi_reduction <maximumf>, %47, %cst_16 [2] : vector<4x8x8xf32> to vector<4x8xf32>
    %49 = vector.shape_cast %48 : vector<4x8xf32> to vector<4x8x1xf32>
    %50 = vector.broadcast %49 : vector<4x8x1xf32> to vector<4x8x8xf32>
    %51 = arith.subf %47, %50 : vector<4x8x8xf32>
    %52 = math.exp %51 : vector<4x8x8xf32>
    %cst_17 = arith.constant dense<0.000000e+00> : vector<4x8xf32>
    %53 = vector.multi_reduction <add>, %52, %cst_17 [2] : vector<4x8x8xf32> to vector<4x8xf32>
    %54 = vector.shape_cast %53 : vector<4x8xf32> to vector<4x8x1xf32>
    %55 = tpu.reciprocal %54 {approx = true} : vector<4x8x1xf32> -> vector<4x8x1xf32>
    %56 = arith.truncf %52 : vector<4x8x8xf32> to vector<4x8x8xbf16>
    "tpu.trace_start"() <{level = 10 : i32, message = "bqk,bkc->bqc"}> : () -> ()
    %cst_18 = arith.constant dense<0.000000e+00> : vector<4x8x8xf32>
    %57 = tpu.matmul %56, %46, %cst_18 {dimension_numbers = #tpu.dot_dimension_numbers<[2], [1], [1], [2], [0, 0, 0, 1, 1, 2], [0], [0]>} : vector<4x8x8xbf16>, vector<4x8x8xbf16>, vector<4x8x8xf32> -> vector<4x8x8xf32>
    "tpu.trace_stop"() : () -> ()
    %58 = vector.broadcast %55 : vector<4x8x1xf32> to vector<4x8x8xf32>
    %59 = arith.mulf %57, %58 : vector<4x8x8xf32>
    %60 = vector.shape_cast %59 : vector<4x8x8xf32> to vector<1x4x8x8xf32>
    %61 = tpu.transpose %60, [0, 2, 1, 3] : vector<1x4x8x8xf32> -> vector<1x8x4x8xf32>
    %62 = vector.shape_cast %61 : vector<1x8x4x8xf32> to vector<8x32xf32>
    %63 = arith.truncf %62 : vector<8x32xf32> to vector<8x32xbf16>
    %c0_19 = arith.constant 0 : index
    %c0_20 = arith.constant 0 : index
    %64 = vector.load %arg6[%c0_19, %c0_20] : memref<32x32xbf16, #tpu.memory_space<vmem>>, vector<32x32xbf16>
    %cst_21 = arith.constant dense<0.000000e+00> : vector<8x32xf32>
    %65 = tpu.matmul %63, %64, %cst_21 {dimension_numbers = #tpu.dot_dimension_numbers<[1], [0], [0], [1], [0, 0, 1, 1], [], []>} : vector<8x32xbf16>, vector<32x32xbf16>, vector<8x32xf32> -> vector<8x32xf32>
    %c0_22 = arith.constant 0 : index
    %c0_23 = arith.constant 0 : index
    %66 = vector.load %arg7[%c0_22, %c0_23] : memref<1x32xf32, #tpu.memory_space<vmem>>, vector<1x32xf32>
    %67 = vector.broadcast %66 : vector<1x32xf32> to vector<8x32xf32>
    %68 = arith.addf %65, %67 : vector<8x32xf32>
    %69 = vector.shape_cast %68 : vector<8x32xf32> to vector<1x8x32xf32>
    %c0_24 = arith.constant 0 : index
    %c0_25 = arith.constant 0 : index
    %c0_26 = arith.constant 0 : index
    %70 = vector.load %arg8[%c0_24, %c0_25, %c0_26] : memref<1x8x32xf32, #tpu.memory_space<vmem>>, vector<1x8x32xf32>
    tpu.vector_store %arg8[%c0_24, %c0_25, %c0_26], %69 {strides = array<i32>} : memref<1x8x32xf32, #tpu.memory_space<vmem>>, vector<1x8x32xf32>,
    return
  }
  func.func @transform_0(%arg0: i32) -> (i32, i32, i32) {
    %c0_i32 = arith.constant 0 : i32
    %c0_i32_0 = arith.constant 0 : i32
    %c0_i32_1 = arith.constant 0 : i32
    return %arg0, %c0_i32, %c0_i32_0 : i32, i32, i32
  }
  func.func @transform_1(%arg0: i32) -> (i32, i32) {
    %c0_i32 = arith.constant 0 : i32
    %c0_i32_0 = arith.constant 0 : i32
    %c0_i32_1 = arith.constant 0 : i32
    return %c0_i32, %c0_i32_0 : i32, i32
  }
  func.func @transform_2(%arg0: i32) -> (i32, i32) {
    %c0_i32 = arith.constant 0 : i32
    %c0_i32_0 = arith.constant 0 : i32
    %c0_i32_1 = arith.constant 0 : i32
    return %c0_i32, %c0_i32_0 : i32, i32
  }
  func.func @transform_3(%arg0: i32) -> (i32, i32) {
    %c0_i32 = arith.constant 0 : i32
    %c0_i32_0 = arith.constant 0 : i32
    %c0_i32_1 = arith.constant 0 : i32
    return %c0_i32, %c0_i32_0 : i32, i32
  }
  func.func @transform_4(%arg0: i32) -> (i32, i32) {
    %c0_i32 = arith.constant 0 : i32
    %c0_i32_0 = arith.constant 0 : i32
    %c0_i32_1 = arith.constant 0 : i32
    return %c0_i32, %c0_i32_0 : i32, i32
  }
  func.func @transform_5(%arg0: i32) -> (i32, i32) {
    %c0_i32 = arith.constant 0 : i32
    %c0_i32_0 = arith.constant 0 : i32
    %c0_i32_1 = arith.constant 0 : i32
    return %c0_i32, %c0_i32_0 : i32, i32
  }
  func.func @transform_6(%arg0: i32) -> (i32, i32) {
    %c0_i32 = arith.constant 0 : i32
    %c0_i32_0 = arith.constant 0 : i32
    %c0_i32_1 = arith.constant 0 : i32
    return %c0_i32, %c0_i32_0 : i32, i32
  }
  func.func @transform_7(%arg0: i32) -> (i32, i32, i32) {
    %c0_i32 = arith.constant 0 : i32
    %c0_i32_0 = arith.constant 0 : i32
    %c0_i32_1 = arith.constant 0 : i32
    return %arg0, %c0_i32, %c0_i32_0 : i32, i32, i32
  }
}

</mosaic_0001>

<llo_original>
// kernel: tpu_custom_call.1
$region0: #{tpu_custom_call.1}
  #allocation0 [shape = 'u32[]', space=smem, size = 0x4, offset = 0x4, fixed_abs, tag = 'smem constant byte address 0x4 - core index']
  #allocation1 [shape = 'u32[72,128]{1,0:T(1,128)}', space=vmem, size = 0x9000, scoped, tag = 'internal scratch']
  %s0 = inlined_call_operand.hbm [shape: f32[2,8,32], index: 0, kind: input, shape index: {}]
  %s1 = inlined_call_operand.hbm [shape: f32[1,32], index: 1, kind: input, shape index: {}]
  %s2 = inlined_call_operand.vmem [shape: f32[1,32], index: 2, kind: input, shape index: {}]
  %s3 = inlined_call_operand.hbm [shape: bf16[32,128], index: 3, kind: input, shape index: {}]
  %s4 = inlined_call_operand.vmem [shape: f32[1,128], index: 4, kind: input, shape index: {}]
  %s5 = inlined_call_operand.hbm [shape: bf16[32,32], index: 5, kind: input, shape index: {}]
  %s6 = inlined_call_operand.vmem [shape: f32[1,32], index: 6, kind: input, shape index: {}]
  %s7 = inlined_call_operand.hbm [shape: f32[2,8,32], index: 7, kind: output, shape index: {}]
  %s8 = sld [smem:[#allocation0]]
  $region77: #{tpu_custom_call.1} parent=0
    _
  %s10 = ssub.s32 1, %s8
  %s11 = scalar_select 0, %s10, %s8
  $region1: #{tpu_custom_call.1} parent=0
    #allocation2 [shape = 'u8[8192]{0}', space=vmem, size = 0x2000, scoped, tag = 'input window, operand 0']
    #allocation3 [shape = 's32[2]{0}', space=sflag, size = 0x8, scoped, tag = 'scoped memory for tpu_custom_call.1']
    #allocation4 [shape = 's32[2]{0}', space=sflag, size = 0x8, scoped, tag = 'scoped memory for tpu_custom_call.1']
    #allocation5 [shape = 'u8[512]{0}', space=vmem, size = 0x400, scoped, tag = 'input window, operand 1, single buffered']
    #allocation6 [shape = 's32[1]{0}', space=sflag, size = 0x4, scoped, tag = 'scoped memory for tpu_custom_call.1']
    #allocation7 [shape = 'u8[8192]{0}', space=vmem, size = 0x2000, scoped, tag = 'input window, operand 3, single buffered']
    #allocation8 [shape = 'u8[8192]{0}', space=vmem, size = 0x2000, scoped, tag = 'input window, operand 5, single buffered']
    #allocation9 [shape = 's32[1]{0}', space=sflag, size = 0x4, scoped, tag = 'scoped memory for tpu_custom_call.1']
    #allocation10 [shape = 'u8[8192]{0}', space=vmem, size = 0x2000, scoped, tag = 'output window, operand 0']
    %12 = vsyncpa [#allocation3], 0
    %s13 = scalar_lea.sflag [#allocation3], 1
    %14 = vsyncpa %s13, 0
    %15 = vsyncpa [#allocation6], 0
    %16 = vsyncpa [#allocation9], 0
    %17 = vsyncpa [#allocation4], 0
    %s18 = scalar_lea.sflag [#allocation4], 1
    %19 = vsyncpa %s18, 0
    loop: start=0, step=1, limit=4
    $region2: #{tpu_custom_call.1} parent=1 // loop_pre_header
      _
    $region3: #{tpu_custom_call.1} parent=1 // loop_header
      %s21 = sphi 0, %s25
      %p22 = scmp.ge.s32.totalorder %s21, 4
      %s31 = sphi 0, %s33
      %s34 = sphi 0, %s31
      %s35 = sphi 0, %s34
      %s51 = sphi 0, %s35
      %s55 = sphi 0, %s55
      %s57 = sphi 0, %s55
      %s58 = sphi 0, %s57
      %s72 = sphi 0, %s58
      %s76 = sphi 0, %s76
      %s78 = sphi 0, %s76
      %s79 = sphi 0, %s78
      %s93 = sphi 0, %s79
      %s97 = sphi 0, %s97
      %s99 = sphi 0, %s97
      %s100 = sphi 0, %s99
      %s114 = sphi 0, %s100
      %s118 = sphi 0, %s118
      %s120 = sphi 0, %s118
      %s121 = sphi 0, %s120
      %s135 = sphi 0, %s121
      %s139 = sphi 0, %s139
      %s141 = sphi 0, %s139
      %s142 = sphi 0, %s141
      %s156 = sphi 0, %s142
      %s160 = sphi 0, %s160
      %s162 = sphi 0, %s160
      %s163 = sphi 0, %s162
      %s177 = sphi 0, %s163
      %s183 = sphi 0, %s185
      %s186 = sphi 0, %s183
      %s187 = sphi 0, %s186
      %s203 = sphi 0, %s187
    $region4: #{tpu_custom_call.1} parent=1 // loop_header_branch
      %24 = sbr.rel (%p22) target = $region8
    $region5: #{tpu_custom_call.1} parent=1 // loop_body
      %s26 = ssub.s32 %s21, 1
      %s27 = ssub.s32 %s21, 2
      %s28 = sadd.s32 %s21, 1
      %s29 = ssub.s32 %s21, %s28
      %p30 = scmp.eq.s32.totalorder %s29, 0
      %s32 = sadd.s32 %s31, 1
      %s33 = scalar_select %p30, %s31, %s32
      %p36 = pneg %p30
      %p37 = scmp.eq.s32.totalorder %s21, 1
      %p38 = por %p36, %p37
      %p39 = scmp.ne.s32.totalorder %s31, %s34
      %p40 = scmp.eq.s32.totalorder %s21, 0
      %p41 = por %p39, %p40
      %p42 = scmp.ne.s32.totalorder %s31, %s34
      %p43 = scmp.eq.s32.totalorder %s26, 1
      %p44 = por %p42, %p43
      %p45 = scmp.ne.s32.totalorder %s34, %s35
      %p46 = scmp.eq.s32.totalorder %s26, 0
      %p47 = por %p45, %p46
      %p48 = scmp.ne.s32.totalorder %s34, %s35
      %p49 = scmp.eq.s32.totalorder %s27, 1
      %p50 = por %p48, %p49
      %p52 = scmp.ne.s32.totalorder %s35, %s51
      %p53 = scmp.eq.s32.totalorder %s27, 0
      %p54 = por %p52, %p53
      %s56 = sadd.s32 %s55, 1
      %p59 = scmp.eq.s32.totalorder %s21, 1
      %p60 = scmp.ne.s32.totalorder %s55, %s57
      %p61 = scmp.eq.s32.totalorder %s21, 0
      %p62 = por %p60, %p61
      %p63 = scmp.ne.s32.totalorder %s55, %s57
      %p64 = scmp.eq.s32.totalorder %s26, 1
      %p65 = por %p63, %p64
      %p66 = scmp.ne.s32.totalorder %s57, %s58
      %p67 = scmp.eq.s32.totalorder %s26, 0
      %p68 = por %p66, %p67
      %p69 = scmp.ne.s32.totalorder %s57, %s58
      %p70 = scmp.eq.s32.totalorder %s27, 1
      %p71 = por %p69, %p70
      %p73 = scmp.ne.s32.totalorder %s58, %s72
      %p74 = scmp.eq.s32.totalorder %s27, 0
      %p75 = por %p73, %p74
      %s77 = sadd.s32 %s76, 1
      %p80 = scmp.eq.s32.totalorder %s21, 1
      %p81 = scmp.ne.s32.totalorder %s76, %s78
      %p82 = scmp.eq.s32.totalorder %s21, 0
      %p83 = por %p81, %p82
      %p84 = scmp.ne.s32.totalorder %s76, %s78
      %p85 = scmp.eq.s32.totalorder %s26, 1
      %p86 = por %p84, %p85
      %p87 = scmp.ne.s32.totalorder %s78, %s79
      %p88 = scmp.eq.s32.totalorder %s26, 0
      %p89 = por %p87, %p88
      %p90 = scmp.ne.s32.totalorder %s78, %s79
      %p91 = scmp.eq.s32.totalorder %s27, 1
      %p92 = por %p90, %p91
      %p94 = scmp.ne.s32.totalorder %s79, %s93
      %p95 = scmp.eq.s32.totalorder %s27, 0
      %p96 = por %p94, %p95
      %s98 = sadd.s32 %s97, 1
      %p101 = scmp.eq.s32.totalorder %s21, 1
      %p102 = scmp.ne.s32.totalorder %s97, %s99
      %p103 = scmp.eq.s32.totalorder %s21, 0
      %p104 = por %p102, %p103
      %p105 = scmp.ne.s32.totalorder %s97, %s99
      %p106 = scmp.eq.s32.totalorder %s26, 1
      %p107 = por %p105, %p106
      %p108 = scmp.ne.s32.totalorder %s99, %s100
      %p109 = scmp.eq.s32.totalorder %s26, 0
      %p110 = por %p108, %p109
      %p111 = scmp.ne.s32.totalorder %s99, %s100
      %p112 = scmp.eq.s32.totalorder %s27, 1
      %p113 = por %p111, %p112
      %p115 = scmp.ne.s32.totalorder %s100, %s114
      %p116 = scmp.eq.s32.totalorder %s27, 0
      %p117 = por %p115, %p116
      %s119 = sadd.s32 %s118, 1
      %p122 = scmp.eq.s32.totalorder %s21, 1
      %p123 = scmp.ne.s32.totalorder %s118, %s120
      %p124 = scmp.eq.s32.totalorder %s21, 0
      %p125 = por %p123, %p124
      %p126 = scmp.ne.s32.totalorder %s118, %s120
      %p127 = scmp.eq.s32.totalorder %s26, 1
      %p128 = por %p126, %p127
      %p129 = scmp.ne.s32.totalorder %s120, %s121
      %p130 = scmp.eq.s32.totalorder %s26, 0
      %p131 = por %p129, %p130
      %p132 = scmp.ne.s32.totalorder %s120, %s121
      %p133 = scmp.eq.s32.totalorder %s27, 1
      %p134 = por %p132, %p133
      %p136 = scmp.ne.s32.totalorder %s121, %s135
      %p137 = scmp.eq.s32.totalorder %s27, 0
      %p138 = por %p136, %p137
      %s140 = sadd.s32 %s139, 1
      %p143 = scmp.eq.s32.totalorder %s21, 1
      %p144 = scmp.ne.s32.totalorder %s139, %s141
      %p145 = scmp.eq.s32.totalorder %s21, 0
      %p146 = por %p144, %p145
      %p147 = scmp.ne.s32.totalorder %s139, %s141
      %p148 = scmp.eq.s32.totalorder %s26, 1
      %p149 = por %p147, %p148
      %p150 = scmp.ne.s32.totalorder %s141, %s142
      %p151 = scmp.eq.s32.totalorder %s26, 0
      %p152 = por %p150, %p151
      %p153 = scmp.ne.s32.totalorder %s141, %s142
      %p154 = scmp.eq.s32.totalorder %s27, 1
      %p155 = por %p153, %p154
      %p157 = scmp.ne.s32.totalorder %s142, %s156
      %p158 = scmp.eq.s32.totalorder %s27, 0
      %p159 = por %p157, %p158
      %s161 = sadd.s32 %s160, 1
      %p164 = scmp.eq.s32.totalorder %s21, 1
      %p165 = scmp.ne.s32.totalorder %s160, %s162
      %p166 = scmp.eq.s32.totalorder %s21, 0
      %p167 = por %p165, %p166
      %p168 = scmp.ne.s32.totalorder %s160, %s162
      %p169 = scmp.eq.s32.totalorder %s26, 1
      %p170 = por %p168, %p169
      %p171 = scmp.ne.s32.totalorder %s162, %s163
      %p172 = scmp.eq.s32.totalorder %s26, 0
      %p173 = por %p171, %p172
      %p174 = scmp.ne.s32.totalorder %s162, %s163
      %p175 = scmp.eq.s32.totalorder %s27, 1
      %p176 = por %p174, %p175
      %p178 = scmp.ne.s32.totalorder %s163, %s177
      %p179 = scmp.eq.s32.totalorder %s27, 0
      %p180 = por %p178, %p179
      %s181 = ssub.s32 %s21, %s28
      %p182 = scmp.eq.s32.totalorder %s181, 0
      %s184 = sadd.s32 %s183, 1
      %s185 = scalar_select %p182, %s183, %s184
      %p188 = pneg %p182
      %p189 = scmp.eq.s32.totalorder %s21, 1
      %p190 = por %p188, %p189
      %p191 = scmp.ne.s32.totalorder %s183, %s186
      %p192 = scmp.eq.s32.totalorder %s21, 0
      %p193 = por %p191, %p192
      %p194 = scmp.ne.s32.totalorder %s183, %s186
      %p195 = scmp.eq.s32.totalorder %s26, 1
      %p196 = por %p194, %p195
      %p197 = scmp.ne.s32.totalorder %s186, %s187
      %p198 = scmp.eq.s32.totalorder %s26, 0
      %p199 = por %p197, %p198
      %p200 = scmp.ne.s32.totalorder %s186, %s187
      %p201 = scmp.eq.s32.totalorder %s27, 1
      %p202 = por %p200, %p201
      %p204 = scmp.ne.s32.totalorder %s187, %s203
      %p205 = scmp.eq.s32.totalorder %s27, 0
      %p206 = por %p204, %p205
      %p207 = scmp.le.s32.totalorder 1, %s21
      %p208 = scmp.lt.s32.totalorder %s21, 3
      %p209 = pnand %p207, %p208
      %p210 = pneg %p209
      // Predicated region
      $region9: #{tpu_custom_call.1} parent=5 // pred_check
        _
      $region10: #{tpu_custom_call.1} parent=5 // pred_check_branch
        %212 = sbr.rel (%p209) target = $region12
      $region11: #{tpu_custom_call.1} parent=5 // pred_region
        %s213 = ssub.s32 %s21, 1
        // Predicated region
        $region13: #{tpu_custom_call.1} parent=11 // pred_check
          %p214 = pneg %p68
        $region14: #{tpu_custom_call.1} parent=11 // pred_check_branch
          %216 = sbr.rel (%p214) target = $region16
        $region15: #{tpu_custom_call.1} parent=11 // pred_region
          %218 = vsyncadd [#allocation6], 0
          %s220 = sshll.u32 %s1, 4
          %s221 = int_to_ptr.hbm [resolvable:$true] %s220
          %s222 = sshll.u32 [#allocation5], 4
          %s223 = int_to_ptr.vmem [resolvable:$true] %s222
          %225 = dma.hbm_to_vmem [thread:$0]  %s221, 16, %s223, [#allocation6]
        $region16: #{tpu_custom_call.1} parent=11 // pred_fallthru
          _
        // Predicated region
        $region17: #{tpu_custom_call.1} parent=11 // pred_check
          %p226 = pneg %p89
        $region18: #{tpu_custom_call.1} parent=11 // pred_check_branch
          %228 = sbr.rel (%p226) target = $region20
        $region19: #{tpu_custom_call.1} parent=11 // pred_region
          _
        $region20: #{tpu_custom_call.1} parent=11 // pred_fallthru
          _
        // Predicated region
        $region21: #{tpu_custom_call.1} parent=11 // pred_check
          %p229 = pneg %p110
        $region22: #{tpu_custom_call.1} parent=11 // pred_check_branch
          %231 = sbr.rel (%p229) target = $region24
        $region23: #{tpu_custom_call.1} parent=11 // pred_region
          %233 = vsyncadd [#allocation6], 0
          %s234 = sshll.u32 %s3, 4
          %s235 = int_to_ptr.hbm [resolvable:$true] %s234
          %s236 = sshll.u32 [#allocation7], 4
          %s237 = int_to_ptr.vmem [resolvable:$true] %s236
          %242 = dma.hbm_to_vmem [thread:$0]  %s235, 256, %s237, [#allocation6], 64, 64, 4
        $region24: #{tpu_custom_call.1} parent=11 // pred_fallthru
          _
        // Predicated region
        $region25: #{tpu_custom_call.1} parent=11 // pred_check
          %p243 = pneg %p131
        $region26: #{tpu_custom_call.1} parent=11 // pred_check_branch
          %245 = sbr.rel (%p243) target = $region28
        $region27: #{tpu_custom_call.1} parent=11 // pred_region
          _
        $region28: #{tpu_custom_call.1} parent=11 // pred_fallthru
          _
        // Predicated region
        $region29: #{tpu_custom_call.1} parent=11 // pred_check
          %p246 = pneg %p152
        $region30: #{tpu_custom_call.1} parent=11 // pred_check_branch
          %248 = sbr.rel (%p246) target = $region32
        $region31: #{tpu_custom_call.1} parent=11 // pred_region
          %250 = vsyncadd [#allocation9], 0
          %s251 = sshll.u32 %s5, 4
          %s252 = int_to_ptr.hbm [resolvable:$true] %s251
          %s253 = sshll.u32 [#allocation8], 4
          %s254 = int_to_ptr.vmem [resolvable:$true] %s253
          %259 = dma.hbm_to_vmem [thread:$0]  %s252, 256, %s254, [#allocation9], 64, 64, 4
        $region32: #{tpu_custom_call.1} parent=11 // pred_fallthru
          _
        // Predicated region
        $region33: #{tpu_custom_call.1} parent=11 // pred_check
          %p260 = pneg %p173
        $region34: #{tpu_custom_call.1} parent=11 // pred_check_branch
          %262 = sbr.rel (%p260) target = $region36
        $region35: #{tpu_custom_call.1} parent=11 // pred_region
          _
        $region36: #{tpu_custom_call.1} parent=11 // pred_fallthru
          _
      $region12: #{tpu_custom_call.1} parent=5 // pred_fallthru
        _
      %p263 = scmp.lt.s32.totalorder %s21, 2
      // Predicated region
      $region37: #{tpu_custom_call.1} parent=5 // pred_check
        %p264 = pneg %p263
      $region38: #{tpu_custom_call.1} parent=5 // pred_check_branch
        %266 = sbr.rel (%p264) target = $region40
      $region39: #{tpu_custom_call.1} parent=5 // pred_region
        // Predicated region
        $region41: #{tpu_custom_call.1} parent=39 // pred_check
          %p267 = pneg %p41
        $region42: #{tpu_custom_call.1} parent=39 // pred_check_branch
          %269 = sbr.rel (%p267) target = $region44
        $region43: #{tpu_custom_call.1} parent=39 // pred_region
          %s270 = sand.u32 %s31, 1
          %s271 = scalar_lea.sflag [#allocation3], %s270
          %s272 = sand.u32 %s31, 1
          %s273 = smul.addr %s272, 8
          %s274 = scalar_lea.vmem [#allocation2], %s273
          %276 = vsyncadd %s271, 0
          %s277 = smul.addr %s21, 8
          %s278 = scalar_lea.hbm %s0, %s277
          %s280 = sshll.u32 %s278, 4
          %s281 = int_to_ptr.hbm [resolvable:$true] %s280
          %s282 = sshll.u32 %s274, 4
          %s283 = int_to_ptr.vmem [resolvable:$true] %s282
          %285 = dma.hbm_to_vmem [thread:$0]  %s281, 128, %s283, %s271
        $region44: #{tpu_custom_call.1} parent=39 // pred_fallthru
          _
      $region40: #{tpu_custom_call.1} parent=5 // pred_fallthru
        _
      %p286 = scmp.le.s32.totalorder 1, %s21
      %p287 = scmp.lt.s32.totalorder %s21, 3
      %p288 = pnand %p286, %p287
      %p289 = pneg %p288
      // Predicated region
      $region45: #{tpu_custom_call.1} parent=5 // pred_check
        _
      $region46: #{tpu_custom_call.1} parent=5 // pred_check_branch
        %291 = sbr.rel (%p288) target = $region48
      $region47: #{tpu_custom_call.1} parent=5 // pred_region
        %s292 = ssub.s32 %s21, 1
        %s293 = sand.u32 %s34, 1
        %s294 = scalar_lea.sflag [#allocation3], %s293
        %s295 = sand.u32 %s34, 1
        %s296 = smul.addr %s295, 8
        %s297 = scalar_lea.vmem [#allocation2], %s296
        // Predicated region
        $region49: #{tpu_custom_call.1} parent=47 // pred_check
          %p298 = pneg %p47
        $region50: #{tpu_custom_call.1} parent=47 // pred_check_branch
          %300 = sbr.rel (%p298) target = $region52
        $region51: #{tpu_custom_call.1} parent=47 // pred_region
          %302 = dma.done %s294, 128
        $region52: #{tpu_custom_call.1} parent=47 // pred_fallthru
          _
        // Predicated region
        $region53: #{tpu_custom_call.1} parent=47 // pred_check
          %p303 = pneg %p68
        $region54: #{tpu_custom_call.1} parent=47 // pred_check_branch
          %305 = sbr.rel (%p303) target = $region56
        $region55: #{tpu_custom_call.1} parent=47 // pred_region
          %307 = dma.done [#allocation6], 16
        $region56: #{tpu_custom_call.1} parent=47 // pred_fallthru
          _
        // Predicated region
        $region57: #{tpu_custom_call.1} parent=47 // pred_check
          %p308 = pneg %p110
        $region58: #{tpu_custom_call.1} parent=47 // pred_check_branch
          %310 = sbr.rel (%p308) target = $region60
        $region59: #{tpu_custom_call.1} parent=47 // pred_region
          %312 = dma.done [#allocation6], 256
        $region60: #{tpu_custom_call.1} parent=47 // pred_fallthru
          _
        // Predicated region
        $region61: #{tpu_custom_call.1} parent=47 // pred_check
          %p313 = pneg %p152
        $region62: #{tpu_custom_call.1} parent=47 // pred_check_branch
          %315 = sbr.rel (%p313) target = $region64
        $region63: #{tpu_custom_call.1} parent=47 // pred_region
          %317 = dma.done [#allocation9], 256
        $region64: #{tpu_custom_call.1} parent=47 // pred_fallthru
          _
        %s318 = sand.u32 %s34, 1
        %s319 = scalar_lea.sflag [#allocation3], %s318
        %s320 = sand.u32 %s34, 1
        %s321 = smul.addr %s320, 8
        %s322 = scalar_lea.vmem [#allocation2], %s321
        %p323 = pneg %p47
        %p324 = pneg %p44
        %p325 = pneg %p68
        %p326 = pneg %p65
        %p327 = pneg %p89
        %p328 = pneg %p86
        %p329 = pneg %p110
        %p330 = pneg %p107
        %p331 = pneg %p131
        %p332 = pneg %p128
        %p333 = pneg %p152
        %p334 = pneg %p149
        %p335 = pneg %p173
        %p336 = pneg %p170
        %p337 = pneg %p199
        %p338 = pneg %p196
        %s339 = sand.u32 %s186, 1
        %s340 = scalar_lea.sflag [#allocation4], %s339
        %s341 = sand.u32 %s186, 1
        %s342 = smul.addr %s341, 8
        %s343 = scalar_lea.vmem [#allocation10], %s342
        %v345 = vld [vmem:[%s297] sm:$0xff]
        %vm346 = vcmask 261120
        %v347 = vsel %vm346, %v345, 0.0
        %348 = vadd.xlane.f32.xlu0 %v347
        %v349 = vpop.xlane.xlu0 %348
        %v350 = vrcp.pop 32.0
        %v351 = vmul.f32 32.0, %v350
        %v352 = vsub.f32 1.0, %v351
        %v353 = vmul.f32 %v350, %v352
        %v354 = vadd.f32 %v350, %v353
        %vm355 = vweird.f32 %v350
        %v356 = vsel %vm355, %v350, %v354
        %v357 = vmul.f32 %v349, %v356
        %v358 = vsub.f32 %v345, %v357
        %v359 = vmul.f32 %v358, %v358
        %v360 = vsel %vm346, %v359, 0.0
        %361 = vadd.xlane.f32.xlu0 %v360
        %v362 = vpop.xlane.xlu0 %361
        %v363 = vmul.f32 %v362, %v356
        %v364 = vadd.f32 %v363, 1e-05
        %v365 = vrsqrt.pop %v364
        %v366 = vmul.f32 %v365, %v364
        %v367 = vmul.f32 %v366, %v365
        %v368 = vmul.f32 0.5, %v367
        %v369 = vsub.f32 1.5, %v368
        %v370 = vmul.f32 %v365, %v369
        %vm371 = vweird.f32 %v364
        %vm372 = vweird.f32 %v365
        %vm373 = vmor %vm371, %vm372
        %v374 = vsel %vm373, %v365, %v370
        %v375 = vmul.f32 %v358, %v374
        %v376 = vld [vmem:[#allocation5] sm:$0x1]
        %v378 = vperm.slane %v376, 0
        %v380 = vmul.f32 %v375, %v378
        %v381 = vld [vmem:[%s2] sm:$0x1]
        %v383 = vperm.slane %v381, 0
        %v385 = vadd.f32 %v380, %v383
        %v386 = vpack.c.bf16 %v385, %v385
        %v387 = vld [vmem:[#allocation7] sm:$0xf]
        %v388 = vld [vmem:[#allocation7 + $0x4] sm:$0xf]
        %v389 = vld [vmem:[#allocation7 + $0x8] sm:$0xf]
        %v390 = vld [vmem:[#allocation7 + $0xc] sm:$0xf]
        %v391 = vld [vmem:[%s4] sm:$0x1]
        %v393 = vperm.slane %v391, 0
        %v399 = vunpack.c.l.b16 %v387
        %v400 = vunpack.c.l.b16 %v388
        %v401 = vunpack.c.l.b16 %v389
        %v402 = vunpack.c.l.b16 %v390
        %v403 = vpack.c.b16 %v400, %v399
        %v404 = vpack.c.b16 %v402, %v401
        %v408 = vsel %vm346, %v386, 0
        %410 = vmatpush.bf16.msra.mxu0 0
        %411 = vmatpush.bf16.msra.mxu0 0
        %412 = vmatpush.bf16.msra.mxu0 0
        %413 = vmatpush.bf16.msra.mxu0 0
        %414 = vmatpush.bf16.msra.mxu0 0
        %415 = vmatpush.bf16.msra.mxu0 0
        %416 = vmatpush.bf16.msra.mxu0 %v404
        %417 = vmatpush.bf16.msra.mxu0 %v403
        %418 = vmatmul.bf16.gmra.mxu0 %v408
        %v419 = vpop.f32.mrf.mxu0
        %v420 = vadd.f32 %v393, %v419
        %v421 = vpop.f32.mrf.mxu0
        %422 = vdwg.mxu0
        %424 = vrot.lane.b32.xlu0 %v420, 120
        %v425 = vpop.permute.xlu0 %424
        %427 = vrot.lane.b32.xlu0 %v420, 112
        %v428 = vpop.permute.xlu0 %427
        %430 = vrot.lane.b32.xlu0 %v420, 104
        %v431 = vpop.permute.xlu0 %430
        %v433 = vrot.slane %v428, 4
        %vm434 = vcmask 1047556
        %v435 = vsel %vm434, %v433, %v420
        %v436 = vrot.slane %v420, 4
        %v437 = vsel %vm434, %v428, %v436
        %v439 = vunpack.c.l.s4 1983009808
        %v440 = vunpack.c.0.s8 %v439
        %v441 = vperm.slane %v435, %v440
        %v443 = vunpack.c.l.s4 1983009808
        %v444 = vunpack.c.0.s8 %v443
        %v445 = vperm.slane %v437, %v444
        %v446 = vrot.slane %v431, 4
        %v447 = vsel %vm434, %v446, %v425
        %v448 = vrot.slane %v425, 4
        %v449 = vsel %vm434, %v431, %v448
        %v451 = vunpack.c.l.s4 1983009808
        %v452 = vunpack.c.0.s8 %v451
        %v453 = vperm.slane %v447, %v452
        %v455 = vunpack.c.l.s4 1983009808
        %v456 = vunpack.c.0.s8 %v455
        %v457 = vperm.slane %v449, %v456
        %v458 = vrot.slane %v453, 4
        %v459 = vsel %vm434, %v458, %v441
        %v460 = vrot.slane %v441, 4
        %v461 = vsel %vm434, %v453, %v460
        %v463 = vunpack.c.l.s4 1934713408
        %v464 = vunpack.c.0.s8 %v463
        %v465 = vperm.slane %v459, %v464
        %v467 = vunpack.c.l.s4 1934713408
        %v468 = vunpack.c.0.s8 %v467
        %v469 = vperm.slane %v461, %v468
        %v470 = vrot.slane %v457, 4
        %v471 = vsel %vm434, %v470, %v445
        %v472 = vrot.slane %v445, 4
        %v473 = vsel %vm434, %v457, %v472
        %v475 = vunpack.c.l.s4 1934713408
        %v476 = vunpack.c.0.s8 %v475
        %v477 = vperm.slane %v471, %v476
        %v479 = vunpack.c.l.s4 1934713408
        %v480 = vunpack.c.0.s8 %v479
        %v481 = vperm.slane %v473, %v480
        %v482 = vrot.slane %v465, 4
        %v483 = vsel %vm434, 0.0, %v482
        %v484 = vrot.slane %v469, 4
        %v485 = vsel %vm434, 0.0, %v484
        %v486 = vrot.slane %v477, 4
        %v487 = vsel %vm434, 0.0, %v486
        %v488 = vrot.slane %v481, 4
        %v489 = vsel %vm434, 0.0, %v488
        %v490 = vsel %vm434, %v484, %v465
        %v492 = vunpack.c.l.s4 1983009808
        %v493 = vunpack.c.0.s8 %v492
        %v494 = vperm.slane %v490, %v493
        %v495 = vrot.slane %v485, 4
        %v496 = vsel %vm434, %v495, %v483
        %v498 = vunpack.c.l.s4 1983009808
        %v499 = vunpack.c.0.s8 %v498
        %v500 = vperm.slane %v496, %v499
        %v501 = vsel %vm434, %v488, %v477
        %v503 = vunpack.c.l.s4 1983009808
        %v504 = vunpack.c.0.s8 %v503
        %v505 = vperm.slane %v501, %v504
        %v506 = vrot.slane %v489, 4
        %v507 = vsel %vm434, %v506, %v487
        %v509 = vunpack.c.l.s4 1983009808
        %v510 = vunpack.c.0.s8 %v509
        %v511 = vperm.slane %v507, %v510
        %v512 = vrot.slane %v500, 4
        %v513 = vsel %vm434, %v512, %v494
        %v514 = vrot.slane %v494, 4
        %v515 = vsel %vm434, %v500, %v514
        %v517 = vunpack.c.l.s4 1934713408
        %v518 = vunpack.c.0.s8 %v517
        %v519 = vperm.slane %v513, %v518
        %v521 = vunpack.c.l.s4 1934713408
        %v522 = vunpack.c.0.s8 %v521
        %v523 = vperm.slane %v515, %v522
        %v524 = vrot.slane %v511, 4
        %v525 = vsel %vm434, %v524, %v505
        %v526 = vrot.slane %v505, 4
        %v527 = vsel %vm434, %v511, %v526
        %v529 = vunpack.c.l.s4 1934713408
        %v530 = vunpack.c.0.s8 %v529
        %v531 = vperm.slane %v525, %v530
        %v533 = vunpack.c.l.s4 1934713408
        %v534 = vunpack.c.0.s8 %v533
        %v535 = vperm.slane %v527, %v534
        %v536 = vrot.slane %v531, 4
        %v537 = vsel %vm434, %v536, %v519
        %v538 = vrot.slane %v519, 4
        %v539 = vsel %vm434, %v531, %v538
        %v540 = vrot.slane %v535, 4
        %v541 = vsel %vm434, %v540, %v523
        %v542 = vrot.slane %v523, 4
        %v543 = vsel %vm434, %v535, %v542
        %v544 = vpack.c.bf16 %v537, %v537
        %v545 = vpack.c.bf16 %v539, %v539
        %v546 = vpack.c.bf16 %v541, %v541
        %v547 = vpack.c.bf16 %v543, %v543
        %548 = vrot.lane.b32.xlu0 %v420, 96
        %v549 = vpop.permute.xlu0 %548
        %550 = vrot.lane.b32.xlu0 %v425, 96
        %v551 = vpop.permute.xlu0 %550
        %552 = vrot.lane.b32.xlu0 %v428, 96
        %v553 = vpop.permute.xlu0 %552
        %554 = vrot.lane.b32.xlu0 %v431, 96
        %v555 = vpop.permute.xlu0 %554
        %v560 = vrot.slane %v553, 4
        %v561 = vsel %vm434, %v560, %v549
        %v562 = vrot.slane %v549, 4
        %v563 = vsel %vm434, %v553, %v562
        %v565 = vunpack.c.l.s4 1983009808
        %v566 = vunpack.c.0.s8 %v565
        %v567 = vperm.slane %v561, %v566
        %v569 = vunpack.c.l.s4 1983009808
        %v570 = vunpack.c.0.s8 %v569
        %v571 = vperm.slane %v563, %v570
        %v572 = vrot.slane %v555, 4
        %v573 = vsel %vm434, %v572, %v551
        %v574 = vrot.slane %v551, 4
        %v575 = vsel %vm434, %v555, %v574
        %v577 = vunpack.c.l.s4 1983009808
        %v578 = vunpack.c.0.s8 %v577
        %v579 = vperm.slane %v573, %v578
        %v581 = vunpack.c.l.s4 1983009808
        %v582 = vunpack.c.0.s8 %v581
        %v583 = vperm.slane %v575, %v582
        %v584 = vrot.slane %v579, 4
        %v585 = vsel %vm434, %v584, %v567
        %v586 = vrot.slane %v567, 4
        %v587 = vsel %vm434, %v579, %v586
        %v589 = vunpack.c.l.s4 1934713408
        %v590 = vunpack.c.0.s8 %v589
        %v591 = vperm.slane %v585, %v590
        %v593 = vunpack.c.l.s4 1934713408
        %v594 = vunpack.c.0.s8 %v593
        %v595 = vperm.slane %v587, %v594
        %v596 = vrot.slane %v583, 4
        %v597 = vsel %vm434, %v596, %v571
        %v598 = vrot.slane %v571, 4
        %v599 = vsel %vm434, %v583, %v598
        %v601 = vunpack.c.l.s4 1934713408
        %v602 = vunpack.c.0.s8 %v601
        %v603 = vperm.slane %v597, %v602
        %v605 = vunpack.c.l.s4 1934713408
        %v606 = vunpack.c.0.s8 %v605
        %v607 = vperm.slane %v599, %v606
        %v608 = vrot.slane %v591, 4
        %v609 = vsel %vm434, 0.0, %v608
        %v610 = vrot.slane %v595, 4
        %v611 = vsel %vm434, 0.0, %v610
        %v612 = vrot.slane %v603, 4
        %v613 = vsel %vm434, 0.0, %v612
        %v614 = vrot.slane %v607, 4
        %v615 = vsel %vm434, 0.0, %v614
        %v616 = vsel %vm434, %v610, %v591
        %v618 = vunpack.c.l.s4 1983009808
        %v619 = vunpack.c.0.s8 %v618
        %v620 = vperm.slane %v616, %v619
        %v621 = vrot.slane %v611, 4
        %v622 = vsel %vm434, %v621, %v609
        %v624 = vunpack.c.l.s4 1983009808
        %v625 = vunpack.c.0.s8 %v624
        %v626 = vperm.slane %v622, %v625
        %v627 = vsel %vm434, %v614, %v603
        %v629 = vunpack.c.l.s4 1983009808
        %v630 = vunpack.c.0.s8 %v629
        %v631 = vperm.slane %v627, %v630
        %v632 = vrot.slane %v615, 4
        %v633 = vsel %vm434, %v632, %v613
        %v635 = vunpack.c.l.s4 1983009808
        %v636 = vunpack.c.0.s8 %v635
        %v637 = vperm.slane %v633, %v636
        %v638 = vrot.slane %v626, 4
        %v639 = vsel %vm434, %v638, %v620
        %v640 = vrot.slane %v620, 4
        %v641 = vsel %vm434, %v626, %v640
        %v643 = vunpack.c.l.s4 1934713408
        %v644 = vunpack.c.0.s8 %v643
        %v645 = vperm.slane %v639, %v644
        %v647 = vunpack.c.l.s4 1934713408
        %v648 = vunpack.c.0.s8 %v647
        %v649 = vperm.slane %v641, %v648
        %v650 = vrot.slane %v637, 4
        %v651 = vsel %vm434, %v650, %v631
        %v652 = vrot.slane %v631, 4
        %v653 = vsel %vm434, %v637, %v652
        %v655 = vunpack.c.l.s4 1934713408
        %v656 = vunpack.c.0.s8 %v655
        %v657 = vperm.slane %v651, %v656
        %v659 = vunpack.c.l.s4 1934713408
        %v660 = vunpack.c.0.s8 %v659
        %v661 = vperm.slane %v653, %v660
        %v662 = vrot.slane %v657, 4
        %v663 = vsel %vm434, %v662, %v645
        %v664 = vrot.slane %v645, 4
        %v665 = vsel %vm434, %v657, %v664
        %v666 = vrot.slane %v661, 4
        %v667 = vsel %vm434, %v666, %v649
        %v668 = vrot.slane %v649, 4
        %v669 = vsel %vm434, %v661, %v668
        %v670 = vpack.c.bf16 %v663, %v663
        %v671 = vpack.c.bf16 %v665, %v665
        %v672 = vpack.c.bf16 %v667, %v667
        %v673 = vpack.c.bf16 %v669, %v669
        %674 = vrot.lane.b32.xlu0 %v420, 64
        %v675 = vpop.permute.xlu0 %674
        %676 = vrot.lane.b32.xlu0 %v425, 64
        %v677 = vpop.permute.xlu0 %676
        %678 = vrot.lane.b32.xlu0 %v428, 64
        %v679 = vpop.permute.xlu0 %678
        %680 = vrot.lane.b32.xlu0 %v431, 64
        %v681 = vpop.permute.xlu0 %680
        %v686 = vrot.slane %v679, 4
        %v687 = vsel %vm434, %v686, %v675
        %v688 = vrot.slane %v675, 4
        %v689 = vsel %vm434, %v679, %v688
        %v691 = vunpack.c.l.s4 1983009808
        %v692 = vunpack.c.0.s8 %v691
        %v693 = vperm.slane %v687, %v692
        %v695 = vunpack.c.l.s4 1983009808
        %v696 = vunpack.c.0.s8 %v695
        %v697 = vperm.slane %v689, %v696
        %v698 = vrot.slane %v681, 4
        %v699 = vsel %vm434, %v698, %v677
        %v700 = vrot.slane %v677, 4
        %v701 = vsel %vm434, %v681, %v700
        %v703 = vunpack.c.l.s4 1983009808
        %v704 = vunpack.c.0.s8 %v703
        %v705 = vperm.slane %v699, %v704
        %v707 = vunpack.c.l.s4 1983009808
        %v708 = vunpack.c.0.s8 %v707
        %v709 = vperm.slane %v701, %v708
        %v710 = vrot.slane %v705, 4
        %v711 = vsel %vm434, %v710, %v693
        %v712 = vrot.slane %v693, 4
        %v713 = vsel %vm434, %v705, %v712
        %v715 = vunpack.c.l.s4 1934713408
        %v716 = vunpack.c.0.s8 %v715
        %v717 = vperm.slane %v711, %v716
        %v719 = vunpack.c.l.s4 1934713408
        %v720 = vunpack.c.0.s8 %v719
        %v721 = vperm.slane %v713, %v720
        %v722 = vrot.slane %v709, 4
        %v723 = vsel %vm434, %v722, %v697
        %v724 = vrot.slane %v697, 4
        %v725 = vsel %vm434, %v709, %v724
        %v727 = vunpack.c.l.s4 1934713408
        %v728 = vunpack.c.0.s8 %v727
        %v729 = vperm.slane %v723, %v728
        %v731 = vunpack.c.l.s4 1934713408
        %v732 = vunpack.c.0.s8 %v731
        %v733 = vperm.slane %v725, %v732
        %v734 = vrot.slane %v717, 4
        %v735 = vsel %vm434, 0.0, %v734
        %v736 = vrot.slane %v721, 4
        %v737 = vsel %vm434, 0.0, %v736
        %v738 = vrot.slane %v729, 4
        %v739 = vsel %vm434, 0.0, %v738
        %v740 = vrot.slane %v733, 4
        %v741 = vsel %vm434, 0.0, %v740
        %v742 = vsel %vm434, %v736, %v717
        %v744 = vunpack.c.l.s4 1983009808
        %v745 = vunpack.c.0.s8 %v744
        %v746 = vperm.slane %v742, %v745
        %v747 = vrot.slane %v737, 4
        %v748 = vsel %vm434, %v747, %v735
        %v750 = vunpack.c.l.s4 1983009808
        %v751 = vunpack.c.0.s8 %v750
        %v752 = vperm.slane %v748, %v751
        %v753 = vsel %vm434, %v740, %v729
        %v755 = vunpack.c.l.s4 1983009808
        %v756 = vunpack.c.0.s8 %v755
        %v757 = vperm.slane %v753, %v756
        %v758 = vrot.slane %v741, 4
        %v759 = vsel %vm434, %v758, %v739
        %v761 = vunpack.c.l.s4 1983009808
        %v762 = vunpack.c.0.s8 %v761
        %v763 = vperm.slane %v759, %v762
        %v764 = vrot.slane %v752, 4
        %v765 = vsel %vm434, %v764, %v746
        %v766 = vrot.slane %v746, 4
        %v767 = vsel %vm434, %v752, %v766
        %v769 = vunpack.c.l.s4 1934713408
        %v770 = vunpack.c.0.s8 %v769
        %v771 = vperm.slane %v765, %v770
        %v773 = vunpack.c.l.s4 1934713408
        %v774 = vunpack.c.0.s8 %v773
        %v775 = vperm.slane %v767, %v774
        %v776 = vrot.slane %v763, 4
        %v777 = vsel %vm434, %v776, %v757
        %v778 = vrot.slane %v757, 4
        %v779 = vsel %vm434, %v763, %v778
        %v781 = vunpack.c.l.s4 1934713408
        %v782 = vunpack.c.0.s8 %v781
        %v783 = vperm.slane %v777, %v782
        %v785 = vunpack.c.l.s4 1934713408
        %v786 = vunpack.c.0.s8 %v785
        %v787 = vperm.slane %v779, %v786
        %v788 = vrot.slane %v783, 4
        %v789 = vsel %vm434, %v788, %v771
        %v790 = vrot.slane %v771, 4
        %v791 = vsel %vm434, %v783, %v790
        %v792 = vrot.slane %v787, 4
        %v793 = vsel %vm434, %v792, %v775
        %v794 = vrot.slane %v775, 4
        %v795 = vsel %vm434, %v787, %v794
        %v796 = vpack.c.bf16 %v789, %v789
        %v797 = vpack.c.bf16 %v791, %v791
        %v798 = vpack.c.bf16 %v793, %v793
        %v799 = vpack.c.bf16 %v795, %v795
        %vm800 = vcmask 64512
        %v802 = vsel %vm800, %v544, 0
        %v805 = vsel %vm800, %v670, 0
        %807 = vmatpush.bf16.xpose.msra.mxu0 0
        %808 = vmatpush.bf16.xpose.msra.mxu0 0
        %809 = vmatpush.bf16.xpose.msra.mxu0 0
        %810 = vmatpush.bf16.xpose.msra.mxu0 0
        %811 = vmatpush.bf16.xpose.msra.mxu0 0
        %812 = vmatpush.bf16.xpose.msra.mxu0 0
        %813 = vmatpush.bf16.xpose.msra.mxu0 0
        %814 = vmatpush.bf16.xpose.msra.mxu0 %v805
        %815 = vmatmul.bf16.gmra.mxu0 %v802
        %v816 = vpop.f32.mrf.mxu0
        %v817 = vadd.f32 0.0, %v816
        %v818 = vpop.f32.mrf.mxu0
        %819 = vdwg.mxu0
        %v821 = vsel %vm800, %v545, 0
        %v824 = vsel %vm800, %v671, 0
        %826 = vmatpush.bf16.xpose.msra.mxu0 0
        %827 = vmatpush.bf16.xpose.msra.mxu0 0
        %828 = vmatpush.bf16.xpose.msra.mxu0 0
        %829 = vmatpush.bf16.xpose.msra.mxu0 0
        %830 = vmatpush.bf16.xpose.msra.mxu0 0
        %831 = vmatpush.bf16.xpose.msra.mxu0 0
        %832 = vmatpush.bf16.xpose.msra.mxu0 0
        %833 = vmatpush.bf16.xpose.msra.mxu0 %v824
        %834 = vmatmul.bf16.gmra.mxu0 %v821
        %v835 = vpop.f32.mrf.mxu0
        %v836 = vadd.f32 0.0, %v835
        %v837 = vpop.f32.mrf.mxu0
        %838 = vdwg.mxu0
        %v840 = vsel %vm800, %v546, 0
        %v843 = vsel %vm800, %v672, 0
        %845 = vmatpush.bf16.xpose.msra.mxu0 0
        %846 = vmatpush.bf16.xpose.msra.mxu0 0
        %847 = vmatpush.bf16.xpose.msra.mxu0 0
        %848 = vmatpush.bf16.xpose.msra.mxu0 0
        %849 = vmatpush.bf16.xpose.msra.mxu0 0
        %850 = vmatpush.bf16.xpose.msra.mxu0 0
        %851 = vmatpush.bf16.xpose.msra.mxu0 0
        %852 = vmatpush.bf16.xpose.msra.mxu0 %v843
        %853 = vmatmul.bf16.gmra.mxu0 %v840
        %v854 = vpop.f32.mrf.mxu0
        %v855 = vadd.f32 0.0, %v854
        %v856 = vpop.f32.mrf.mxu0
        %857 = vdwg.mxu0
        %v859 = vsel %vm800, %v547, 0
        %v862 = vsel %vm800, %v673, 0
        %864 = vmatpush.bf16.xpose.msra.mxu0 0
        %865 = vmatpush.bf16.xpose.msra.mxu0 0
        %866 = vmatpush.bf16.xpose.msra.mxu0 0
        %867 = vmatpush.bf16.xpose.msra.mxu0 0
        %868 = vmatpush.bf16.xpose.msra.mxu0 0
        %869 = vmatpush.bf16.xpose.msra.mxu0 0
        %870 = vmatpush.bf16.xpose.msra.mxu0 0
        %871 = vmatpush.bf16.xpose.msra.mxu0 %v862
        %872 = vmatmul.bf16.gmra.mxu0 %v859
        %v873 = vpop.f32.mrf.mxu0
        %v874 = vadd.f32 0.0, %v873
        %v875 = vpop.f32.mrf.mxu0
        %876 = vdwg.mxu0
        %v877 = vsel %vm800, %v817, -inf
        %878 = vmax.xlane.f32.xlu0 %v877
        %v879 = vpop.xlane.xlu0 %878
        %v880 = vsel %vm800, %v836, -inf
        %881 = vmax.xlane.f32.xlu0 %v880
        %v882 = vpop.xlane.xlu0 %881
        %v883 = vsel %vm800, %v855, -inf
        %884 = vmax.xlane.f32.xlu0 %v883
        %v885 = vpop.xlane.xlu0 %884
        %v886 = vsel %vm800, %v874, -inf
        %887 = vmax.xlane.f32.xlu0 %v886
        %v888 = vpop.xlane.xlu0 %887
        %v889 = vsub.f32 %v817, %v879
        %v890 = vsub.f32 %v836, %v882
        %v891 = vsub.f32 %v855, %v885
        %v892 = vsub.f32 %v874, %v888
        %v893 = vmul.f32 %v889, 1.442695
        %v894 = vpow.pop %v893
        %v895 = vmul.f32 %v890, 1.442695
        %v896 = vpow.pop %v895
        %v897 = vmul.f32 %v891, 1.442695
        %v898 = vpow.pop %v897
        %v899 = vmul.f32 %v892, 1.442695
        %v900 = vpow.pop %v899
        %v901 = vsel %vm800, %v894, 0.0
        %902 = vadd.xlane.f32.xlu0 %v901
        %v903 = vpop.xlane.xlu0 %902
        %v904 = vsel %vm800, %v896, 0.0
        %905 = vadd.xlane.f32.xlu0 %v904
        %v906 = vpop.xlane.xlu0 %905
        %v907 = vsel %vm800, %v898, 0.0
        %908 = vadd.xlane.f32.xlu0 %v907
        %v909 = vpop.xlane.xlu0 %908
        %v910 = vsel %vm800, %v900, 0.0
        %911 = vadd.xlane.f32.xlu0 %v910
        %v912 = vpop.xlane.xlu0 %911
        %v913 = vrcp.pop %v903
        %v914 = vrcp.pop %v906
        %v915 = vrcp.pop %v909
        %v916 = vrcp.pop %v912
        %v917 = vpack.c.bf16 %v894, %v894
        %v918 = vpack.c.bf16 %v896, %v896
        %v919 = vpack.c.bf16 %v898, %v898
        %v920 = vpack.c.bf16 %v900, %v900
        %v922 = vsel %vm800, %v917, 0
        %vm924 = vcmask 1043456
        %v926 = vsel %vm924, %v796, 0
        %928 = vmatpush.bf16.msra.mxu0 0
        %929 = vmatpush.bf16.msra.mxu0 0
        %930 = vmatpush.bf16.msra.mxu0 0
        %931 = vmatpush.bf16.msra.mxu0 0
        %932 = vmatpush.bf16.msra.mxu0 0
        %933 = vmatpush.bf16.msra.mxu0 0
        %934 = vmatpush.bf16.msra.mxu0 0
        %935 = vmatpush.bf16.msra.mxu0 %v926
        %936 = vmatmul.bf16.gmra.mxu0 %v922
        %v937 = vpop.f32.mrf.mxu0
        %v938 = vadd.f32 0.0, %v937
        %v939 = vpop.f32.mrf.mxu0
        %940 = vdwg.mxu0
        %v942 = vsel %vm800, %v918, 0
        %v945 = vsel %vm924, %v797, 0
        %947 = vmatpush.bf16.msra.mxu0 0
        %948 = vmatpush.bf16.msra.mxu0 0
        %949 = vmatpush.bf16.msra.mxu0 0
        %950 = vmatpush.bf16.msra.mxu0 0
        %951 = vmatpush.bf16.msra.mxu0 0
        %952 = vmatpush.bf16.msra.mxu0 0
        %953 = vmatpush.bf16.msra.mxu0 0
        %954 = vmatpush.bf16.msra.mxu0 %v945
        %955 = vmatmul.bf16.gmra.mxu0 %v942
        %v956 = vpop.f32.mrf.mxu0
        %v957 = vadd.f32 0.0, %v956
        %v958 = vpop.f32.mrf.mxu0
        %959 = vdwg.mxu0
        %v961 = vsel %vm800, %v919, 0
        %v964 = vsel %vm924, %v798, 0
        %966 = vmatpush.bf16.msra.mxu0 0
        %967 = vmatpush.bf16.msra.mxu0 0
        %968 = vmatpush.bf16.msra.mxu0 0
        %969 = vmatpush.bf16.msra.mxu0 0
        %970 = vmatpush.bf16.msra.mxu0 0
        %971 = vmatpush.bf16.msra.mxu0 0
        %972 = vmatpush.bf16.msra.mxu0 0
        %973 = vmatpush.bf16.msra.mxu0 %v964
        %974 = vmatmul.bf16.gmra.mxu0 %v961
        %v975 = vpop.f32.mrf.mxu0
        %v976 = vadd.f32 0.0, %v975
        %v977 = vpop.f32.mrf.mxu0
        %978 = vdwg.mxu0
        %v980 = vsel %vm800, %v920, 0
        %v983 = vsel %vm924, %v799, 0
        %985 = vmatpush.bf16.msra.mxu0 0
        %986 = vmatpush.bf16.msra.mxu0 0
        %987 = vmatpush.bf16.msra.mxu0 0
        %988 = vmatpush.bf16.msra.mxu0 0
        %989 = vmatpush.bf16.msra.mxu0 0
        %990 = vmatpush.bf16.msra.mxu0 0
        %991 = vmatpush.bf16.msra.mxu0 0
        %992 = vmatpush.bf16.msra.mxu0 %v983
        %993 = vmatmul.bf16.gmra.mxu0 %v980
        %v994 = vpop.f32.mrf.mxu0
        %v995 = vadd.f32 0.0, %v994
        %v996 = vpop.f32.mrf.mxu0
        %997 = vdwg.mxu0
        %v998 = vmul.f32 %v938, %v913
        %v999 = vmul.f32 %v957, %v914
        %v1000 = vmul.f32 %v976, %v915
        %v1001 = vmul.f32 %v995, %v916
        %v1002 = vrot.slane %v1000, 4
        %v1003 = vsel %vm434, %v1002, %v998
        %v1004 = vrot.slane %v998, 4
        %v1005 = vsel %vm434, %v1000, %v1004
        %v1007 = vunpack.c.l.s4 1983009808
        %v1008 = vunpack.c.0.s8 %v1007
        %v1009 = vperm.slane %v1003, %v1008
        %v1011 = vunpack.c.l.s4 1983009808
        %v1012 = vunpack.c.0.s8 %v1011
        %v1013 = vperm.slane %v1005, %v1012
        %v1014 = vrot.slane %v1001, 4
        %v1015 = vsel %vm434, %v1014, %v999
        %v1016 = vrot.slane %v999, 4
        %v1017 = vsel %vm434, %v1001, %v1016
        %v1019 = vunpack.c.l.s4 1983009808
        %v1020 = vunpack.c.0.s8 %v1019
        %v1021 = vperm.slane %v1015, %v1020
        %v1023 = vunpack.c.l.s4 1983009808
        %v1024 = vunpack.c.0.s8 %v1023
        %v1025 = vperm.slane %v1017, %v1024
        %v1026 = vrot.slane %v1021, 4
        %v1027 = vsel %vm434, %v1026, %v1009
        %v1028 = vrot.slane %v1009, 4
        %v1029 = vsel %vm434, %v1021, %v1028
        %v1031 = vunpack.c.l.s4 1934713408
        %v1032 = vunpack.c.0.s8 %v1031
        %v1033 = vperm.slane %v1027, %v1032
        %v1035 = vunpack.c.l.s4 1934713408
        %v1036 = vunpack.c.0.s8 %v1035
        %v1037 = vperm.slane %v1029, %v1036
        %v1038 = vrot.slane %v1025, 4
        %v1039 = vsel %vm434, %v1038, %v1013
        %v1040 = vrot.slane %v1013, 4
        %v1041 = vsel %vm434, %v1025, %v1040
        %v1043 = vunpack.c.l.s4 1934713408
        %v1044 = vunpack.c.0.s8 %v1043
        %v1045 = vperm.slane %v1039, %v1044
        %v1047 = vunpack.c.l.s4 1934713408
        %v1048 = vunpack.c.0.s8 %v1047
        %v1049 = vperm.slane %v1041, %v1048
        %v1050 = vrot.slane %v1033, 4
        %v1051 = vsel %vm434, 0.0, %v1050
        %v1052 = vrot.slane %v1037, 4
        %v1053 = vsel %vm434, 0.0, %v1052
        %v1054 = vrot.slane %v1045, 4
        %v1055 = vsel %vm434, 0.0, %v1054
        %v1056 = vrot.slane %v1049, 4
        %v1057 = vsel %vm434, 0.0, %v1056
        %v1058 = vsel %vm434, %v1052, %v1033
        %v1060 = vunpack.c.l.s4 1983009808
        %v1061 = vunpack.c.0.s8 %v1060
        %v1062 = vperm.slane %v1058, %v1061
        %v1063 = vrot.slane %v1053, 4
        %v1064 = vsel %vm434, %v1063, %v1051
        %v1066 = vunpack.c.l.s4 1983009808
        %v1067 = vunpack.c.0.s8 %v1066
        %v1068 = vperm.slane %v1064, %v1067
        %v1069 = vsel %vm434, %v1056, %v1045
        %v1071 = vunpack.c.l.s4 1983009808
        %v1072 = vunpack.c.0.s8 %v1071
        %v1073 = vperm.slane %v1069, %v1072
        %v1074 = vrot.slane %v1057, 4
        %v1075 = vsel %vm434, %v1074, %v1055
        %v1077 = vunpack.c.l.s4 1983009808
        %v1078 = vunpack.c.0.s8 %v1077
        %v1079 = vperm.slane %v1075, %v1078
        %v1080 = vrot.slane %v1068, 4
        %v1081 = vsel %vm434, %v1080, %v1062
        %v1082 = vrot.slane %v1062, 4
        %v1083 = vsel %vm434, %v1068, %v1082
        %v1085 = vunpack.c.l.s4 1934713408
        %v1086 = vunpack.c.0.s8 %v1085
        %v1087 = vperm.slane %v1081, %v1086
        %v1089 = vunpack.c.l.s4 1934713408
        %v1090 = vunpack.c.0.s8 %v1089
        %v1091 = vperm.slane %v1083, %v1090
        %v1092 = vrot.slane %v1079, 4
        %v1093 = vsel %vm434, %v1092, %v1073
        %v1094 = vrot.slane %v1073, 4
        %v1095 = vsel %vm434, %v1079, %v1094
        %v1097 = vunpack.c.l.s4 1934713408
        %v1098 = vunpack.c.0.s8 %v1097
        %v1099 = vperm.slane %v1093, %v1098
        %v1101 = vunpack.c.l.s4 1934713408
        %v1102 = vunpack.c.0.s8 %v1101
        %v1103 = vperm.slane %v1095, %v1102
        %v1104 = vrot.slane %v1099, 4
        %v1105 = vsel %vm434, %v1104, %v1087
        %v1106 = vrot.slane %v1087, 4
        %v1107 = vsel %vm434, %v1099, %v1106
        %v1108 = vrot.slane %v1103, 4
        %v1109 = vsel %vm434, %v1108, %v1091
        %v1110 = vrot.slane %v1091, 4
        %v1111 = vsel %vm434, %v1103, %v1110
        %1113 = vrot.lane.b32.xlu0 %v1107, 8
        %v1114 = vpop.permute.xlu0 %1113
        %1117 = vrot.lane.b32.xlu0 %v1109, 16
        %v1118 = vpop.permute.xlu0 %1117
        %1121 = vrot.lane.b32.xlu0 %v1111, 24
        %v1122 = vpop.permute.xlu0 %1121
        %v1124 = vsel %vm800, %v1105, %v1114
        %vm1125 = vcmask 130048
        %v1126 = vsel %vm1125, %v1124, %v1118
        %vm1127 = vcmask 195584
        %v1128 = vsel %vm1127, %v1126, %v1122
        %v1129 = vpack.c.bf16 %v1128, %v1128
        %v1130 = vld [vmem:[#allocation8] sm:$0xf]
        %v1131 = vld [vmem:[#allocation8 + $0x4] sm:$0xf]
        %v1132 = vld [vmem:[#allocation8 + $0x8] sm:$0xf]
        %v1133 = vld [vmem:[#allocation8 + $0xc] sm:$0xf]
        %v1134 = vld [vmem:[%s6] sm:$0x1]
        %v1136 = vperm.slane %v1134, 0
        %v1142 = vunpack.c.l.b16 %v1130
        %v1143 = vunpack.c.l.b16 %v1131
        %v1144 = vunpack.c.l.b16 %v1132
        %v1145 = vunpack.c.l.b16 %v1133
        %v1146 = vpack.c.b16 %v1143, %v1142
        %v1147 = vpack.c.b16 %v1145, %v1144
        %v1151 = vsel %vm346, %v1129, 0
        %1153 = vmatpush.bf16.msra.mxu0 0
        %1154 = vmatpush.bf16.msra.mxu0 0
        %1155 = vmatpush.bf16.msra.mxu0 0
        %1156 = vmatpush.bf16.msra.mxu0 0
        %1157 = vmatpush.bf16.msra.mxu0 0
        %1158 = vmatpush.bf16.msra.mxu0 0
        %1159 = vmatpush.bf16.msra.mxu0 %v1147
        %1160 = vmatpush.bf16.msra.mxu0 %v1146
        %1161 = vmatmul.bf16.gmra.mxu0 %v1151
        %v1162 = vpop.f32.mrf.mxu0
        %v1163 = vadd.f32 %v1136, %v1162
        %v1164 = vpop.f32.mrf.mxu0
        %1165 = vdwg.mxu0
        %1166 = vst.msk [vmem:[%s343] sm:$0xff] %vm346, %v1163
        %s1167 = sand.u32 %s186, 1
        %s1168 = scalar_lea.sflag [#allocation4], %s1167
        %s1169 = sand.u32 %s186, 1
        %s1170 = smul.addr %s1169, 8
        %s1171 = scalar_lea.vmem [#allocation10], %s1170
        // Predicated region
        $region65: #{tpu_custom_call.1} parent=47 // pred_check
          %p1172 = pneg %p196
        $region66: #{tpu_custom_call.1} parent=47 // pred_check_branch
          %1174 = sbr.rel (%p1172) target = $region68
        $region67: #{tpu_custom_call.1} parent=47 // pred_region
          %1176 = vsyncadd %s1168, 0
          %s1177 = smul.addr %s26, 8
          %s1178 = scalar_lea.hbm %s7, %s1177
          %s1180 = sshll.u32 %s1171, 4
          %s1181 = int_to_ptr.vmem [resolvable:$true] %s1180
          %s1182 = sshll.u32 %s1178, 4
          %s1183 = int_to_ptr.hbm [resolvable:$true] %s1182
          %1185 = dma.vmem_to_hbm [thread:$0]  %s1181, 128, %s1183, %s1168
        $region68: #{tpu_custom_call.1} parent=47 // pred_fallthru
          _
      $region48: #{tpu_custom_call.1} parent=5 // pred_fallthru
        _
      %p1186 = scmp.le.s32.totalorder 2, %s21
      // Predicated region
      $region69: #{tpu_custom_call.1} parent=5 // pred_check
        %p1187 = pneg %p1186
      $region70: #{tpu_custom_call.1} parent=5 // pred_check_branch
        %1189 = sbr.rel (%p1187) target = $region72
      $region71: #{tpu_custom_call.1} parent=5 // pred_region
        %s1190 = ssub.s32 %s21, 2
        // Predicated region
        $region73: #{tpu_custom_call.1} parent=71 // pred_check
          %p1191 = pneg %p202
        $region74: #{tpu_custom_call.1} parent=71 // pred_check_branch
          %1193 = sbr.rel (%p1191) target = $region76
        $region75: #{tpu_custom_call.1} parent=71 // pred_region
          %s1194 = sand.u32 %s187, 1
          %s1195 = scalar_lea.sflag [#allocation4], %s1194
          %s1196 = sand.u32 %s187, 1
          %s1197 = smul.addr %s1196, 8
          %s1198 = scalar_lea.vmem [#allocation10], %s1197
          %1200 = dma.done %s1195, 128
        $region76: #{tpu_custom_call.1} parent=71 // pred_fallthru
          _
      $region72: #{tpu_custom_call.1} parent=5 // pred_fallthru
        _
    $region6: #{tpu_custom_call.1} parent=1 // loop_footer
      %s25 = sadd.s32 1, %s21
    $region7: #{tpu_custom_call.1} parent=1 // loop_footer_branch
      %20 = sbr.rel target = $region3
    $region8: #{tpu_custom_call.1} parent=1 // loop_exit
      _
    %1201 = vsyncpa [#allocation3], 1
    %s1202 = scalar_lea.sflag [#allocation3], 1
    %1203 = vsyncpa %s1202, 1
    %1204 = vsyncpa [#allocation6], 1
    %1205 = vsyncpa [#allocation9], 1
    %1206 = vsyncpa [#allocation4], 1
    %s1207 = scalar_lea.sflag [#allocation4], 1
    %1208 = vsyncpa %s1207, 1

</llo_original>
